<compile_context>
chip_gen: v6e
topology: v6e:2x2x1
jax: 0.10.0
libtpu: 0.0.40
codegen_flags: <defaults>
</compile_context>

<pallas_src>
import functools
import math

import jax
import jax.numpy as jnp
import numpy as np
from jax import lax
from jax.experimental import pallas as pl
from jax.experimental.pallas import tpu as pltpu

EPS = 1e-5


def _dense_layer_kernel(x_ref, g1_ref, b1_ref, w1_ref, g2_ref, b2_ref, w2_ref,
                        o_ref, zbuf_ref, *, n_batch):
    """Fused BN1+ReLU+conv1x1 -> BN2+ReLU+conv3x3(pad=1).

    Layouts (channels on sublanes, (w, n) spatial on lanes, h leading):
      x_ref   : (H, Cin,  W*N)     input, lane index = w*N + n
      w1_ref  : (Cmid, Cin)        1x1 conv weight
      w2_ref  : (3, Cout, 3*Cmid)  3x3 conv weight, [kw][co][kh*Cmid + ci]
      g*/b*   : (C, 1)             BN gamma / beta
      o_ref   : (H, Cout, W*N)
      zbuf_ref: (H+2, Cmid, W*N)   VMEM scratch, h-padded bottleneck activation
    """
    H, Cin, WN = x_ref.shape
    Cmid = zbuf_ref.shape[1]
    Cout = o_ref.shape[1]
    NB = n_batch
    inv_R = 1.0 / (H * WN)

    # ---- Pass A: BN1 statistics (single streaming pass, per-lane partials). --
    def stats1(h, carry):
        s, ss = carry
        xr = x_ref[h, :, :]                                   # (Cin, WN)
        return s + xr, ss + xr * xr

    zc1 = jnp.zeros((Cin, WN), jnp.float32)
    s1, ss1 = lax.fori_loop(0, H, stats1, (zc1, zc1))
    mean1 = jnp.sum(s1, axis=1, keepdims=True) * inv_R        # (Cin, 1)
    var1 = jnp.sum(ss1, axis=1, keepdims=True) * inv_R - mean1 * mean1
    scale1 = g1_ref[...] * lax.rsqrt(var1 + EPS)
    shift1 = b1_ref[...] - mean1 * scale1

    # ---- Pass B: z1 = relu(bn1(x)); y = W1 @ z1 row by row into the padded
    #      scratch interior; BN2 statistics accumulated on the fly. -----------
    w1 = w1_ref[...]                                          # (Cmid, Cin)

    def bottleneck(h, carry):
        s, ss = carry
        z1 = jnp.maximum(x_ref[h, :, :] * scale1 + shift1, 0.0)
        yr = jnp.dot(w1, z1, preferred_element_type=jnp.float32)   # (Cmid, WN)
        zbuf_ref[h + 1, :, :] = yr
        return s + yr, ss + yr * yr

    zc2 = jnp.zeros((Cmid, WN), jnp.float32)
    s2, ss2 = lax.fori_loop(0, H, bottleneck, (zc2, zc2))
    mean2 = jnp.sum(s2, axis=1, keepdims=True) * inv_R
    var2 = jnp.sum(ss2, axis=1, keepdims=True) * inv_R - mean2 * mean2
    scale2 = g2_ref[...] * lax.rsqrt(var2 + EPS)
    shift2 = b2_ref[...] - mean2 * scale2

    # Halo-only zeroing (interior rows already hold y).
    zbuf_ref[0, :, :] = jnp.zeros((Cmid, WN), jnp.float32)
    zbuf_ref[H + 1, :, :] = jnp.zeros((Cmid, WN), jnp.float32)

    # ---- Pass C: in-place BN2 + ReLU on the interior rows. -------------------
    @pl.loop(0, H)
    def _(h):
        yr = zbuf_ref[h + 1, :, :]
        zbuf_ref[h + 1, :, :] = jnp.maximum(yr * scale2 + shift2, 0.0)

    # ---- Pass D: 3x3 conv (padding=1), one lane-dense output row per step. ---
    w2 = w2_ref[...]                                          # (3, Cout, 3*Cmid)

    @pl.loop(0, H)
    def _(h):
        rows = zbuf_ref[pl.ds(h, 3), :, :]                    # (3, Cmid, WN)
        zpad = jnp.zeros((3, Cmid, NB), jnp.float32)
        # kw=0 / kw=2 sources: shift by one w-group (N lanes); the inserted
        # zero column is exactly the conv's zero padding at the W edges.
        left = jnp.concatenate([zpad, rows[:, :, :WN - NB]], axis=2)
        right = jnp.concatenate([rows[:, :, NB:], zpad], axis=2)
        acc = jnp.zeros((Cout, WN), jnp.float32)
        for kw, src in enumerate((left, rows, right)):
            zk = src.reshape(3 * Cmid, WN)                    # kh merged into K
            acc = acc + jnp.dot(w2[kw], zk,
                                preferred_element_type=jnp.float32)
        o_ref[h, :, :] = acc


def dense_layer_forward(prev_features, g1, b1, w1_oihw, g2, b2, w2_oihw):
    """Forward of _DenseLayer. prev_features: list of NCHW arrays. Returns NCHW."""
    x = jnp.concatenate(prev_features, axis=1)                # (N, Cin, H, W)
    N, Cin, H, W = x.shape
    Cmid = w1_oihw.shape[0]
    Cout = w2_oihw.shape[0]
    WN = W * N

    # channels -> sublanes, (w, n) -> lanes, h -> leading (row-tiled) axis.
    x_t = jnp.transpose(x, (2, 1, 3, 0)).reshape(H, Cin, WN)
    w1 = w1_oihw[:, :, 0, 0]                                  # (Cmid, Cin)
    # (Cout, Cmid, kh, kw) -> [kw][co][kh*Cmid + ci]
    w2 = jnp.transpose(w2_oihw, (3, 0, 2, 1)).reshape(3, Cout, 3 * Cmid)

    kernel = functools.partial(_dense_layer_kernel, n_batch=N)
    out_t = pl.pallas_call(
        kernel,
        out_shape=jax.ShapeDtypeStruct((H, Cout, WN), jnp.float32),
        grid=(1,),
        in_specs=[
            pl.BlockSpec((H, Cin, WN), lambda i: (0, 0, 0)),
            pl.BlockSpec((Cin, 1), lambda i: (0, 0)),
            pl.BlockSpec((Cin, 1), lambda i: (0, 0)),
            pl.BlockSpec((Cmid, Cin), lambda i: (0, 0)),
            pl.BlockSpec((Cmid, 1), lambda i: (0, 0)),
            pl.BlockSpec((Cmid, 1), lambda i: (0, 0)),
            pl.BlockSpec((3, Cout, 3 * Cmid), lambda i: (0, 0, 0)),
        ],
        out_specs=pl.BlockSpec((H, Cout, WN), lambda i: (0, 0, 0)),
        scratch_shapes=[pltpu.VMEM((H + 2, Cmid, WN), jnp.float32)],
        compiler_params=pltpu.CompilerParams(
            dimension_semantics=("arbitrary",)),
    )(x_t, g1.reshape(Cin, 1), b1.reshape(Cin, 1), w1,
      g2.reshape(Cmid, 1), b2.reshape(Cmid, 1), w2)

    # (H, Cout, W*N) -> NCHW
    out = jnp.transpose(out_t.reshape(H, Cout, W, N), (3, 1, 0, 2))
    return out


# ---------------------------------------------------------------------------
# Pure-JAX reference (mirrors the PyTorch module in training mode, drop_rate=0).
def ref_forward(prev_features, g1, b1, w1_oihw, g2, b2, w2_oihw):
    x = jnp.concatenate(prev_features, axis=1)

    def bn(t, g, b):
        m = t.mean(axis=(0, 2, 3), keepdims=True)
        v = ((t - m) ** 2).mean(axis=(0, 2, 3), keepdims=True)
        return g[None, :, None, None] * (t - m) * lax.rsqrt(v + EPS) \
            + b[None, :, None, None]

    h = jax.nn.relu(bn(x, g1, b1))
    y = lax.conv_general_dilated(
        h, w1_oihw, (1, 1), 'VALID',
        dimension_numbers=('NCHW', 'OIHW', 'NCHW'),
        precision=lax.Precision.HIGHEST)
    h2 = jax.nn.relu(bn(y, g2, b2))
    out = lax.conv_general_dilated(
        h2, w2_oihw, (1, 1), ((1, 1), (1, 1)),
        dimension_numbers=('NCHW', 'OIHW', 'NCHW'),
        precision=lax.Precision.HIGHEST)
    return out


# ---------------------------------------------------------------------------
if __name__ == "__main__":
    # Module config: num_input_features=20, growth_rate=8, bn_size=4, drop_rate=0
    N, H, W = 8, 16, 16              # W*N = 128 -> one lane tile per h-row
    c_prev = (12, 8)                 # two previous feature maps -> 20 channels
    Cin = sum(c_prev)
    growth_rate, bn_size = 8, 4
    Cmid = bn_size * growth_rate     # 32
    Cout = growth_rate               # 8

    key = jax.random.PRNGKey(0)
    k_w1, k_w2, k_x1, k_x2 = jax.random.split(key, 4)

    # Kaiming-normal conv weights (fan_in, gain=sqrt(2)), as in _init_weight.
    w1_oihw = jax.random.normal(k_w1, (Cmid, Cin, 1, 1), jnp.float32) \
        * math.sqrt(2.0 / (Cin * 1 * 1))
    w2_oihw = jax.random.normal(k_w2, (Cout, Cmid, 3, 3), jnp.float32) \
        * math.sqrt(2.0 / (Cmid * 3 * 3))
    # BatchNorm params: weight=1, bias=0.
    g1 = jnp.ones((Cin,), jnp.float32)
    b1 = jnp.zeros((Cin,), jnp.float32)
    g2 = jnp.ones((Cmid,), jnp.float32)
    b2 = jnp.zeros((Cmid,), jnp.float32)

    # prev_features (NCHW), as passed to forward(*prev_features).
    x1 = jax.random.normal(k_x1, (N, c_prev[0], H, W), jnp.float32)
    x2 = jax.random.normal(k_x2, (N, c_prev[1], H, W), jnp.float32)
    prev = [x1, x2]

    out = jax.block_until_ready(
        dense_layer_forward(prev, g1, b1, w1_oihw, g2, b2, w2_oihw))
    ref = jax.block_until_ready(
        ref_forward(prev, g1, b1, w1_oihw, g2, b2, w2_oihw))

    assert out.shape == (N, Cout, H, W), out.shape
    np.testing.assert_allclose(np.asarray(out), np.asarray(ref),
                               rtol=1e-3, atol=1e-3)
    print("KERNEL_OK")
</pallas_src>

<mosaic_0001>
module attributes {stable_mosaic.version = 11 : i64} {
  func.func @_dense_layer_kernel(%arg0: i32, %arg1: memref<16x20x128xf32, #tpu.memory_space<vmem>>, %arg2: memref<20x1xf32, #tpu.memory_space<vmem>>, %arg3: memref<20x1xf32, #tpu.memory_space<vmem>>, %arg4: memref<32x20xf32, #tpu.memory_space<vmem>>, %arg5: memref<32x1xf32, #tpu.memory_space<vmem>>, %arg6: memref<32x1xf32, #tpu.memory_space<vmem>>, %arg7: memref<3x8x96xf32, #tpu.memory_space<vmem>>, %arg8: memref<16x8x128xf32, #tpu.memory_space<vmem>>, %arg9: memref<18x32x128xf32, #tpu.memory_space<vmem>>) attributes {dimension_semantics = [#tpu.dimension_semantics<arbitrary>], iteration_bounds = array<i64: 1>, scalar_prefetch = 0 : i64, scratch_operands = 1 : i64, tpu.core_type = #tpu.core_type<tc>, window_params = [{pipeline_mode = #tpu.pipeline_mode<synchronous>, transform_indices = @transform_0, window_bounds = array<i64: 16, 20, 128>}, {pipeline_mode = #tpu.pipeline_mode<synchronous>, transform_indices = @transform_1, window_bounds = array<i64: 20, 1>}, {pipeline_mode = #tpu.pipeline_mode<synchronous>, transform_indices = @transform_2, window_bounds = array<i64: 20, 1>}, {pipeline_mode = #tpu.pipeline_mode<synchronous>, transform_indices = @transform_3, window_bounds = array<i64: 32, 20>}, {pipeline_mode = #tpu.pipeline_mode<synchronous>, transform_indices = @transform_4, window_bounds = array<i64: 32, 1>}, {pipeline_mode = #tpu.pipeline_mode<synchronous>, transform_indices = @transform_5, window_bounds = array<i64: 32, 1>}, {pipeline_mode = #tpu.pipeline_mode<synchronous>, transform_indices = @transform_6, window_bounds = array<i64: 3, 8, 96>}, {pipeline_mode = #tpu.pipeline_mode<synchronous>, transform_indices = @transform_7, window_bounds = array<i64: 16, 8, 128>}]} {
    %cst = arith.constant 0.000000e+00 : f32
    %0 = vector.broadcast %cst : f32 to vector<20x128xf32>
    %c0_i32 = arith.constant 0 : i32
    %c16_i32 = arith.constant 16 : i32
    %1 = arith.addi %c0_i32, %c16_i32 : i32
    %c1_i32 = arith.constant 1 : i32
    %2:2 = scf.for %arg10 = %c0_i32 to %1 step %c1_i32 iter_args(%arg11 = %0, %arg12 = %0) -> (vector<20x128xf32>, vector<20x128xf32>)  : i32 {
      %54 = arith.index_cast %arg10 : i32 to index
      %c0_43 = arith.constant 0 : index
      %c0_44 = arith.constant 0 : index
      %55 = vector.load %arg1[%54, %c0_43, %c0_44] : memref<16x20x128xf32, #tpu.memory_space<vmem>>, vector<1x20x128xf32>
      %56 = vector.shape_cast %55 : vector<1x20x128xf32> to vector<20x128xf32>
      %57 = arith.addf %arg11, %56 : vector<20x128xf32>
      %58 = arith.mulf %56, %56 : vector<20x128xf32>
      %59 = arith.addf %arg12, %58 : vector<20x128xf32>
      scf.yield %57, %59 : vector<20x128xf32>, vector<20x128xf32>
    }
    %c16_i32_0 = arith.constant 16 : i32
    %cst_1 = arith.constant dense<0.000000e+00> : vector<20xf32>
    %3 = vector.multi_reduction <add>, %2#0, %cst_1 [1] : vector<20x128xf32> to vector<20xf32>
    %4 = vector.shape_cast %3 : vector<20xf32> to vector<20x1xf32>
    %cst_2 = arith.constant 4.8828125E-4 : f32
    %5 = vector.broadcast %cst_2 : f32 to vector<20x1xf32>
    %6 = arith.mulf %4, %5 : vector<20x1xf32>
    %cst_3 = arith.constant dense<0.000000e+00> : vector<20xf32>
    %7 = vector.multi_reduction <add>, %2#1, %cst_3 [1] : vector<20x128xf32> to vector<20xf32>
    %8 = vector.shape_cast %7 : vector<20xf32> to vector<20x1xf32>
    %cst_4 = arith.constant 4.8828125E-4 : f32
    %9 = vector.broadcast %cst_4 : f32 to vector<20x1xf32>
    %10 = arith.mulf %8, %9 : vector<20x1xf32>
    %11 = arith.mulf %6, %6 : vector<20x1xf32>
    %12 = arith.subf %10, %11 : vector<20x1xf32>
    %c0 = arith.constant 0 : index
    %c0_5 = arith.constant 0 : index
    %13 = vector.load %arg2[%c0, %c0_5] : memref<20x1xf32, #tpu.memory_space<vmem>>, vector<20x1xf32>
    %cst_6 = arith.constant 9.99999974E-6 : f32
    %14 = vector.broadcast %cst_6 : f32 to vector<20x1xf32>
    %15 = arith.addf %12, %14 : vector<20x1xf32>
    %16 = math.rsqrt %15 : vector<20x1xf32>
    %17 = arith.mulf %13, %16 : vector<20x1xf32>
    %c0_7 = arith.constant 0 : index
    %c0_8 = arith.constant 0 : index
    %18 = vector.load %arg3[%c0_7, %c0_8] : memref<20x1xf32, #tpu.memory_space<vmem>>, vector<20x1xf32>
    %19 = arith.mulf %6, %17 : vector<20x1xf32>
    %20 = arith.subf %18, %19 : vector<20x1xf32>
    %c0_9 = arith.constant 0 : index
    %c0_10 = arith.constant 0 : index
    %21 = vector.load %arg4[%c0_9, %c0_10] : memref<32x20xf32, #tpu.memory_space<vmem>>, vector<32x20xf32>
    %cst_11 = arith.constant 0.000000e+00 : f32
    %22 = vector.broadcast %cst_11 : f32 to vector<32x128xf32>
    %c0_i32_12 = arith.constant 0 : i32
    %c16_i32_13 = arith.constant 16 : i32
    %23 = arith.addi %c0_i32_12, %c16_i32_13 : i32
    %c1_i32_14 = arith.constant 1 : i32
    %24:2 = scf.for %arg10 = %c0_i32_12 to %23 step %c1_i32_14 iter_args(%arg11 = %22, %arg12 = %22) -> (vector<32x128xf32>, vector<32x128xf32>)  : i32 {
      %54 = arith.index_cast %arg10 : i32 to index
      %c0_43 = arith.constant 0 : index
      %c0_44 = arith.constant 0 : index
      %55 = vector.load %arg1[%54, %c0_43, %c0_44] : memref<16x20x128xf32, #tpu.memory_space<vmem>>, vector<1x20x128xf32>
      %56 = vector.shape_cast %55 : vector<1x20x128xf32> to vector<20x128xf32>
      %57 = vector.broadcast %17 : vector<20x1xf32> to vector<20x128xf32>
      %58 = arith.mulf %56, %57 : vector<20x128xf32>
      %59 = vector.broadcast %20 : vector<20x1xf32> to vector<20x128xf32>
      %60 = arith.addf %58, %59 : vector<20x128xf32>
      %cst_45 = arith.constant 0.000000e+00 : f32
      %61 = vector.broadcast %cst_45 : f32 to vector<20x128xf32>
      %62 = arith.maximumf %60, %61 : vector<20x128xf32>
      %cst_46 = arith.constant dense<0.000000e+00> : vector<32x128xf32>
      %63 = tpu.matmul %21, %62, %cst_46 {dimension_numbers = #tpu.dot_dimension_numbers<[1], [0], [0], [1], [0, 0, 1, 1], [], []>} : vector<32x20xf32>, vector<20x128xf32>, vector<32x128xf32> -> vector<32x128xf32>
      %c1_i32_47 = arith.constant 1 : i32
      %64 = arith.addi %arg10, %c1_i32_47 : i32
      %65 = arith.index_cast %64 : i32 to index
      %c0_48 = arith.constant 0 : index
      %c0_49 = arith.constant 0 : index
      %66 = vector.load %arg9[%65, %c0_48, %c0_49] : memref<18x32x128xf32, #tpu.memory_space<vmem>>, vector<1x32x128xf32>
      %67 = vector.shape_cast %66 : vector<1x32x128xf32> to vector<32x128xf32>
      %68 = vector.shape_cast %63 : vector<32x128xf32> to vector<1x32x128xf32>
      tpu.vector_store %arg9[%65, %c0_48, %c0_49], %68 {strides = array<i32>} : memref<18x32x128xf32, #tpu.memory_space<vmem>>, vector<1x32x128xf32>,
      %69 = arith.addf %arg11, %63 : vector<32x128xf32>
      %70 = arith.mulf %63, %63 : vector<32x128xf32>
      %71 = arith.addf %arg12, %70 : vector<32x128xf32>
      scf.yield %69, %71 : vector<32x128xf32>, vector<32x128xf32>
    }
    %c16_i32_15 = arith.constant 16 : i32
    %cst_16 = arith.constant dense<0.000000e+00> : vector<32xf32>
    %25 = vector.multi_reduction <add>, %24#0, %cst_16 [1] : vector<32x128xf32> to vector<32xf32>
    %26 = vector.shape_cast %25 : vector<32xf32> to vector<32x1xf32>
    %cst_17 = arith.constant 4.8828125E-4 : f32
    %27 = vector.broadcast %cst_17 : f32 to vector<32x1xf32>
    %28 = arith.mulf %26, %27 : vector<32x1xf32>
    %cst_18 = arith.constant dense<0.000000e+00> : vector<32xf32>
    %29 = vector.multi_reduction <add>, %24#1, %cst_18 [1] : vector<32x128xf32> to vector<32xf32>
    %30 = vector.shape_cast %29 : vector<32xf32> to vector<32x1xf32>
    %cst_19 = arith.constant 4.8828125E-4 : f32
    %31 = vector.broadcast %cst_19 : f32 to vector<32x1xf32>
    %32 = arith.mulf %30, %31 : vector<32x1xf32>
    %33 = arith.mulf %28, %28 : vector<32x1xf32>
    %34 = arith.subf %32, %33 : vector<32x1xf32>
    %c0_20 = arith.constant 0 : index
    %c0_21 = arith.constant 0 : index
    %35 = vector.load %arg5[%c0_20, %c0_21] : memref<32x1xf32, #tpu.memory_space<vmem>>, vector<32x1xf32>
    %cst_22 = arith.constant 9.99999974E-6 : f32
    %36 = vector.broadcast %cst_22 : f32 to vector<32x1xf32>
    %37 = arith.addf %34, %36 : vector<32x1xf32>
    %38 = math.rsqrt %37 : vector<32x1xf32>
    %39 = arith.mulf %35, %38 : vector<32x1xf32>
    %c0_23 = arith.constant 0 : index
    %c0_24 = arith.constant 0 : index
    %40 = vector.load %arg6[%c0_23, %c0_24] : memref<32x1xf32, #tpu.memory_space<vmem>>, vector<32x1xf32>
    %41 = arith.mulf %28, %39 : vector<32x1xf32>
    %42 = arith.subf %40, %41 : vector<32x1xf32>
    %cst_25 = arith.constant 0.000000e+00 : f32
    %43 = vector.broadcast %cst_25 : f32 to vector<32x128xf32>
    %c0_26 = arith.constant 0 : index
    %c0_27 = arith.constant 0 : index
    %c0_28 = arith.constant 0 : index
    %44 = vector.load %arg9[%c0_26, %c0_27, %c0_28] : memref<18x32x128xf32, #tpu.memory_space<vmem>>, vector<1x32x128xf32>
    %45 = vector.shape_cast %44 : vector<1x32x128xf32> to vector<32x128xf32>
    %46 = vector.shape_cast %43 : vector<32x128xf32> to vector<1x32x128xf32>
    tpu.vector_store %arg9[%c0_26, %c0_27, %c0_28], %46 {strides = array<i32>} : memref<18x32x128xf32, #tpu.memory_space<vmem>>, vector<1x32x128xf32>,
    %cst_29 = arith.constant 0.000000e+00 : f32
    %47 = vector.broadcast %cst_29 : f32 to vector<32x128xf32>
    %c17 = arith.constant 17 : index
    %c0_30 = arith.constant 0 : index
    %c0_31 = arith.constant 0 : index
    %48 = vector.load %arg9[%c17, %c0_30, %c0_31] : memref<18x32x128xf32, #tpu.memory_space<vmem>>, vector<1x32x128xf32>
    %49 = vector.shape_cast %48 : vector<1x32x128xf32> to vector<32x128xf32>
    %50 = vector.shape_cast %47 : vector<32x128xf32> to vector<1x32x128xf32>
    tpu.vector_store %arg9[%c17, %c0_30, %c0_31], %50 {strides = array<i32>} : memref<18x32x128xf32, #tpu.memory_space<vmem>>, vector<1x32x128xf32>,
    %c0_i32_32 = arith.constant 0 : i32
    %c16_i32_33 = arith.constant 16 : i32
    %51 = arith.addi %c0_i32_32, %c16_i32_33 : i32
    %c1_i32_34 = arith.constant 1 : i32
    scf.for %arg10 = %c0_i32_32 to %51 step %c1_i32_34  : i32 {
      %c1_i32_43 = arith.constant 1 : i32
      %54 = arith.muli %arg10, %c1_i32_43 : i32
      %c0_i32_44 = arith.constant 0 : i32
      %55 = arith.addi %c0_i32_44, %54 : i32
      %c1_i32_45 = arith.constant 1 : i32
      %56 = arith.addi %55, %c1_i32_45 : i32
      %57 = arith.index_cast %56 : i32 to index
      %c0_46 = arith.constant 0 : index
      %c0_47 = arith.constant 0 : index
      %58 = vector.load %arg9[%57, %c0_46, %c0_47] : memref<18x32x128xf32, #tpu.memory_space<vmem>>, vector<1x32x128xf32>
      %59 = vector.shape_cast %58 : vector<1x32x128xf32> to vector<32x128xf32>
      %60 = vector.broadcast %39 : vector<32x1xf32> to vector<32x128xf32>
      %61 = arith.mulf %59, %60 : vector<32x128xf32>
      %62 = vector.broadcast %42 : vector<32x1xf32> to vector<32x128xf32>
      %63 = arith.addf %61, %62 : vector<32x128xf32>
      %cst_48 = arith.constant 0.000000e+00 : f32
      %64 = vector.broadcast %cst_48 : f32 to vector<32x128xf32>
      %65 = arith.maximumf %63, %64 : vector<32x128xf32>
      %c1_i32_49 = arith.constant 1 : i32
      %66 = arith.addi %55, %c1_i32_49 : i32
      %67 = arith.index_cast %66 : i32 to index
      %c0_50 = arith.constant 0 : index
      %c0_51 = arith.constant 0 : index
      %68 = vector.load %arg9[%67, %c0_50, %c0_51] : memref<18x32x128xf32, #tpu.memory_space<vmem>>, vector<1x32x128xf32>
      %69 = vector.shape_cast %68 : vector<1x32x128xf32> to vector<32x128xf32>
      %70 = vector.shape_cast %65 : vector<32x128xf32> to vector<1x32x128xf32>
      tpu.vector_store %arg9[%67, %c0_50, %c0_51], %70 {strides = array<i32>} : memref<18x32x128xf32, #tpu.memory_space<vmem>>, vector<1x32x128xf32>,
    }
    %c16_i32_35 = arith.constant 16 : i32
    %c0_36 = arith.constant 0 : index
    %c0_37 = arith.constant 0 : index
    %c0_38 = arith.constant 0 : index
    %52 = vector.load %arg7[%c0_36, %c0_37, %c0_38] : memref<3x8x96xf32, #tpu.memory_space<vmem>>, vector<3x8x96xf32>
    %c0_i32_39 = arith.constant 0 : i32
    %c16_i32_40 = arith.constant 16 : i32
    %53 = arith.addi %c0_i32_39, %c16_i32_40 : i32
    %c1_i32_41 = arith.constant 1 : i32
    scf.for %arg10 = %c0_i32_39 to %53 step %c1_i32_41  : i32 {
      %c1_i32_43 = arith.constant 1 : i32
      %54 = arith.muli %arg10, %c1_i32_43 : i32
      %c0_i32_44 = arith.constant 0 : i32
      %55 = arith.addi %c0_i32_44, %54 : i32
      %56 = arith.index_cast %55 : i32 to index
      %c0_45 = arith.constant 0 : index
      %c0_46 = arith.constant 0 : index
      %57 = vector.load %arg9[%56, %c0_45, %c0_46] : memref<18x32x128xf32, #tpu.memory_space<vmem>>, vector<3x32x128xf32>
      %cst_47 = arith.constant 0.000000e+00 : f32
      %58 = vector.broadcast %cst_47 : f32 to vector<3x32x8xf32>
      %59 = vector.extract_strided_slice %57 {offsets = [0, 0, 0], sizes = [3, 32, 120], strides = [1, 1, 1]} : vector<3x32x128xf32> to vector<3x32x120xf32>
      %60 = tpu.concatenate %58, %59 in 2 : vector<3x32x8xf32>, vector<3x32x120xf32> -> vector<3x32x128xf32>
      %61 = vector.extract_strided_slice %57 {offsets = [0, 0, 8], sizes = [3, 32, 120], strides = [1, 1, 1]} : vector<3x32x128xf32> to vector<3x32x120xf32>
      %62 = tpu.concatenate %61, %58 in 2 : vector<3x32x120xf32>, vector<3x32x8xf32> -> vector<3x32x128xf32>
      %cst_48 = arith.constant 0.000000e+00 : f32
      %63 = vector.broadcast %cst_48 : f32 to vector<8x128xf32>
      %64 = vector.shape_cast %60 : vector<3x32x128xf32> to vector<96x128xf32>
      %65 = vector.extract_strided_slice %52 {offsets = [0, 0, 0], sizes = [1, 8, 96], strides = [1, 1, 1]} : vector<3x8x96xf32> to vector<1x8x96xf32>
      %66 = vector.shape_cast %65 : vector<1x8x96xf32> to vector<8x96xf32>
      %cst_49 = arith.constant dense<0.000000e+00> : vector<8x128xf32>
      %67 = tpu.matmul %66, %64, %cst_49 {dimension_numbers = #tpu.dot_dimension_numbers<[1], [0], [0], [1], [0, 0, 1, 1], [], []>} : vector<8x96xf32>, vector<96x128xf32>, vector<8x128xf32> -> vector<8x128xf32>
      %68 = arith.addf %63, %67 : vector<8x128xf32>
      %69 = vector.shape_cast %57 : vector<3x32x128xf32> to vector<96x128xf32>
      %70 = vector.extract_strided_slice %52 {offsets = [1, 0, 0], sizes = [1, 8, 96], strides = [1, 1, 1]} : vector<3x8x96xf32> to vector<1x8x96xf32>
      %71 = vector.shape_cast %70 : vector<1x8x96xf32> to vector<8x96xf32>
      %cst_50 = arith.constant dense<0.000000e+00> : vector<8x128xf32>
      %72 = tpu.matmul %71, %69, %cst_50 {dimension_numbers = #tpu.dot_dimension_numbers<[1], [0], [0], [1], [0, 0, 1, 1], [], []>} : vector<8x96xf32>, vector<96x128xf32>, vector<8x128xf32> -> vector<8x128xf32>
      %73 = arith.addf %68, %72 : vector<8x128xf32>
      %74 = vector.shape_cast %62 : vector<3x32x128xf32> to vector<96x128xf32>
      %75 = vector.extract_strided_slice %52 {offsets = [2, 0, 0], sizes = [1, 8, 96], strides = [1, 1, 1]} : vector<3x8x96xf32> to vector<1x8x96xf32>
      %76 = vector.shape_cast %75 : vector<1x8x96xf32> to vector<8x96xf32>
      %cst_51 = arith.constant dense<0.000000e+00> : vector<8x128xf32>
      %77 = tpu.matmul %76, %74, %cst_51 {dimension_numbers = #tpu.dot_dimension_numbers<[1], [0], [0], [1], [0, 0, 1, 1], [], []>} : vector<8x96xf32>, vector<96x128xf32>, vector<8x128xf32> -> vector<8x128xf32>
      %78 = arith.addf %73, %77 : vector<8x128xf32>
      %79 = arith.index_cast %55 : i32 to index
      %c0_52 = arith.constant 0 : index
      %c0_53 = arith.constant 0 : index
      %80 = vector.load %arg8[%79, %c0_52, %c0_53] : memref<16x8x128xf32, #tpu.memory_space<vmem>>, vector<1x8x128xf32>
      %81 = vector.shape_cast %80 : vector<1x8x128xf32> to vector<8x128xf32>
      %82 = vector.shape_cast %78 : vector<8x128xf32> to vector<1x8x128xf32>
      tpu.vector_store %arg8[%79, %c0_52, %c0_53], %82 {strides = array<i32>} : memref<16x8x128xf32, #tpu.memory_space<vmem>>, vector<1x8x128xf32>,
    }
    %c16_i32_42 = arith.constant 16 : i32
    return
  }
  func.func @transform_0(%arg0: i32) -> (i32, i32, i32) {
    %c0_i32 = arith.constant 0 : i32
    %c0_i32_0 = arith.constant 0 : i32
    %c0_i32_1 = arith.constant 0 : i32
    %c0_i32_2 = arith.constant 0 : i32
    return %c0_i32, %c0_i32_0, %c0_i32_1 : i32, i32, i32
  }
  func.func @transform_1(%arg0: i32) -> (i32, i32) {
    %c0_i32 = arith.constant 0 : i32
    %c0_i32_0 = arith.constant 0 : i32
    %c0_i32_1 = arith.constant 0 : i32
    return %c0_i32, %c0_i32_0 : i32, i32
  }
  func.func @transform_2(%arg0: i32) -> (i32, i32) {
    %c0_i32 = arith.constant 0 : i32
    %c0_i32_0 = arith.constant 0 : i32
    %c0_i32_1 = arith.constant 0 : i32
    return %c0_i32, %c0_i32_0 : i32, i32
  }
  func.func @transform_3(%arg0: i32) -> (i32, i32) {
    %c0_i32 = arith.constant 0 : i32
    %c0_i32_0 = arith.constant 0 : i32
    %c0_i32_1 = arith.constant 0 : i32
    return %c0_i32, %c0_i32_0 : i32, i32
  }
  func.func @transform_4(%arg0: i32) -> (i32, i32) {
    %c0_i32 = arith.constant 0 : i32
    %c0_i32_0 = arith.constant 0 : i32
    %c0_i32_1 = arith.constant 0 : i32
    return %c0_i32, %c0_i32_0 : i32, i32
  }
  func.func @transform_5(%arg0: i32) -> (i32, i32) {
    %c0_i32 = arith.constant 0 : i32
    %c0_i32_0 = arith.constant 0 : i32
    %c0_i32_1 = arith.constant 0 : i32
    return %c0_i32, %c0_i32_0 : i32, i32
  }
  func.func @transform_6(%arg0: i32) -> (i32, i32, i32) {
    %c0_i32 = arith.constant 0 : i32
    %c0_i32_0 = arith.constant 0 : i32
    %c0_i32_1 = arith.constant 0 : i32
    %c0_i32_2 = arith.constant 0 : i32
    return %c0_i32, %c0_i32_0, %c0_i32_1 : i32, i32, i32
  }
  func.func @transform_7(%arg0: i32) -> (i32, i32, i32) {
    %c0_i32 = arith.constant 0 : i32
    %c0_i32_0 = arith.constant 0 : i32
    %c0_i32_1 = arith.constant 0 : i32
    %c0_i32_2 = arith.constant 0 : i32
    return %c0_i32, %c0_i32_0, %c0_i32_1 : i32, i32, i32
  }
}

</mosaic_0001>

<llo_original>
// kernel: tpu_custom_call.1
$region0: #{tpu_custom_call.1}
  #allocation0 [shape = 'u32[]', space=smem, size = 0x4, offset = 0x4, fixed_abs, tag = 'smem constant byte address 0x4 - core index']
  #allocation1 [shape = 'u32[144,128]{1,0:T(1,128)}', space=vmem, size = 0x12000, scoped, tag = 'internal scratch']
  #allocation2 [shape = 'f32[18,32,128]{2,1,0:T(8,128)}', space=vmem, size = 0x48000, scoped, tag = 'scratch operand']
  %s0 = inlined_call_operand.vmem [shape: f32[16,20,128], index: 0, kind: input, shape index: {}]
  %s1 = inlined_call_operand.vmem [shape: f32[20,1], index: 1, kind: input, shape index: {}]
  %s2 = inlined_call_operand.vmem [shape: f32[20,1], index: 2, kind: input, shape index: {}]
  %s3 = inlined_call_operand.vmem [shape: f32[32,20], index: 3, kind: input, shape index: {}]
  %s4 = inlined_call_operand.vmem [shape: f32[32,1], index: 4, kind: input, shape index: {}]
  %s5 = inlined_call_operand.vmem [shape: f32[32,1], index: 5, kind: input, shape index: {}]
  %s6 = inlined_call_operand.vmem [shape: f32[3,8,96], index: 6, kind: input, shape index: {}]
  %s7 = inlined_call_operand.hbm [shape: f32[16,8,128], index: 7, kind: output, shape index: {}]
  %s8 = sld [smem:[#allocation0]]
  $region66: #{tpu_custom_call.1} parent=0
    _
  %s10 = ssub.s32 1, %s8
  %s11 = scalar_select 0, %s10, %s8
  $region1: #{tpu_custom_call.1} parent=0
    #allocation3 [shape = 'u8[65536]{0}', space=vmem, size = 0x10000, scoped, tag = 'output window, operand 0, single buffered']
    #allocation4 [shape = 's32[1]{0}', space=sflag, size = 0x4, scoped, tag = 'scoped memory for tpu_custom_call.1']
    %12 = vsyncpa [#allocation4], 0
    // Predicated region
    $region2: #{tpu_custom_call.1} parent=1 // pred_check
      _
    $region3: #{tpu_custom_call.1} parent=1 // pred_check_branch
      %14 = sbr.rel (0) target = $region5
    $region4: #{tpu_custom_call.1} parent=1 // pred_region
      _
    $region5: #{tpu_custom_call.1} parent=1 // pred_fallthru
      _
    // Predicated region
    $region6: #{tpu_custom_call.1} parent=1 // pred_check
      _
    $region7: #{tpu_custom_call.1} parent=1 // pred_check_branch
      %16 = sbr.rel (0) target = $region9
    $region8: #{tpu_custom_call.1} parent=1 // pred_region
      _
    $region9: #{tpu_custom_call.1} parent=1 // pred_fallthru
      _
    // Predicated region
    $region10: #{tpu_custom_call.1} parent=1 // pred_check
      _
    $region11: #{tpu_custom_call.1} parent=1 // pred_check_branch
      %18 = sbr.rel (0) target = $region13
    $region12: #{tpu_custom_call.1} parent=1 // pred_region
      _
    $region13: #{tpu_custom_call.1} parent=1 // pred_fallthru
      _
    // Predicated region
    $region14: #{tpu_custom_call.1} parent=1 // pred_check
      _
    $region15: #{tpu_custom_call.1} parent=1 // pred_check_branch
      %20 = sbr.rel (0) target = $region17
    $region16: #{tpu_custom_call.1} parent=1 // pred_region
      _
    $region17: #{tpu_custom_call.1} parent=1 // pred_fallthru
      _
    // Predicated region
    $region18: #{tpu_custom_call.1} parent=1 // pred_check
      _
    $region19: #{tpu_custom_call.1} parent=1 // pred_check_branch
      %22 = sbr.rel (0) target = $region21
    $region20: #{tpu_custom_call.1} parent=1 // pred_region
      _
    $region21: #{tpu_custom_call.1} parent=1 // pred_fallthru
      _
    // Predicated region
    $region22: #{tpu_custom_call.1} parent=1 // pred_check
      _
    $region23: #{tpu_custom_call.1} parent=1 // pred_check_branch
      %24 = sbr.rel (0) target = $region25
    $region24: #{tpu_custom_call.1} parent=1 // pred_region
      _
    $region25: #{tpu_custom_call.1} parent=1 // pred_fallthru
      _
    // Predicated region
    $region26: #{tpu_custom_call.1} parent=1 // pred_check
      _
    $region27: #{tpu_custom_call.1} parent=1 // pred_check_branch
      %26 = sbr.rel (0) target = $region29
    $region28: #{tpu_custom_call.1} parent=1 // pred_region
      _
    $region29: #{tpu_custom_call.1} parent=1 // pred_fallthru
      _
    loop: start=0, step=1, limit=16
    $region30: #{tpu_custom_call.1} parent=1 // loop_pre_header
      _
    $region31: #{tpu_custom_call.1} parent=1 // loop_header
      %s28 = sphi 0, %s32
      %p29 = scmp.ge.s32.totalorder %s28, 16
      %v33 = vphi 0.0, %v44
      %v34 = vphi 0.0, %v45
      %v35 = vphi 0.0, %v46
      %v36 = vphi 0.0, %v50
      %v37 = vphi 0.0, %v51
      %v38 = vphi 0.0, %v52
    $region32: #{tpu_custom_call.1} parent=1 // loop_header_branch
      %31 = sbr.rel (%p29) target = $region36
    $region33: #{tpu_custom_call.1} parent=1 // loop_body
      %s39 = smul.u32 %s28, 24
      %s40 = scalar_lea.vmem %s0, %s39
      %v41 = vld [vmem:[%s40] sm:$0xff]
      %v42 = vld [vmem:[%s40 + $0x8] sm:$0xff]
      %v43 = vld [vmem:[%s40 + $0x10] sm:$0xf]
      %v44 = vadd.f32 %v33, %v41
      %v45 = vadd.f32 %v34, %v42
      %v46 = vadd.f32 %v35, %v43
      %v47 = vmul.f32 %v41, %v41
      %v48 = vmul.f32 %v42, %v42
      %v49 = vmul.f32 %v43, %v43
      %v50 = vadd.f32 %v36, %v47
      %v51 = vadd.f32 %v37, %v48
      %v52 = vadd.f32 %v38, %v49
    $region34: #{tpu_custom_call.1} parent=1 // loop_footer
      %s32 = sadd.s32 1, %s28
    $region35: #{tpu_custom_call.1} parent=1 // loop_footer_branch
      %27 = sbr.rel target = $region31
    $region36: #{tpu_custom_call.1} parent=1 // loop_exit
      _
    %53 = vadd.xlane.f32.xlu0 %v33
    %v54 = vpop.xlane.xlu0 %53
    %55 = vadd.xlane.f32.xlu0 %v34
    %v56 = vpop.xlane.xlu0 %55
    %vm57 = vcmask 1043456
    %v58 = vsel %vm57, %v35, 0.0
    %59 = vadd.xlane.f32.xlu0 %v58
    %v60 = vpop.xlane.xlu0 %59
    %v61 = vmul.f32 %v54, 0.00048828125
    %v62 = vmul.f32 %v56, 0.00048828125
    %v63 = vmul.f32 %v60, 0.00048828125
    %64 = vadd.xlane.f32.xlu0 %v36
    %v65 = vpop.xlane.xlu0 %64
    %66 = vadd.xlane.f32.xlu0 %v37
    %v67 = vpop.xlane.xlu0 %66
    %v68 = vsel %vm57, %v38, 0.0
    %69 = vadd.xlane.f32.xlu0 %v68
    %v70 = vpop.xlane.xlu0 %69
    %v71 = vmul.f32 %v65, 0.00048828125
    %v72 = vmul.f32 %v67, 0.00048828125
    %v73 = vmul.f32 %v70, 0.00048828125
    %v74 = vmul.f32 %v61, %v61
    %v75 = vmul.f32 %v62, %v62
    %v76 = vmul.f32 %v63, %v63
    %v77 = vsub.f32 %v71, %v74
    %v78 = vsub.f32 %v72, %v75
    %v79 = vsub.f32 %v73, %v76
    %v80 = vld [vmem:[%s1] sm:$0xff]
    %v81 = vld [vmem:[%s1 + $0x8] sm:$0xff]
    %v82 = vld [vmem:[%s1 + $0x10] sm:$0xf]
    %v83 = vadd.f32 %v77, 1e-05
    %v84 = vadd.f32 %v78, 1e-05
    %v85 = vadd.f32 %v79, 1e-05
    %v86 = vrsqrt.pop %v83
    %v87 = vrsqrt.pop %v84
    %v88 = vrsqrt.pop %v85
    %v89 = vmul.f32 %v80, %v86
    %v90 = vmul.f32 %v81, %v87
    %v91 = vmul.f32 %v82, %v88
    %v92 = vld [vmem:[%s2] sm:$0xff]
    %v93 = vld [vmem:[%s2 + $0x8] sm:$0xff]
    %v94 = vld [vmem:[%s2 + $0x10] sm:$0xf]
    %v95 = vmul.f32 %v61, %v89
    %v96 = vmul.f32 %v62, %v90
    %v97 = vmul.f32 %v63, %v91
    %v98 = vsub.f32 %v92, %v95
    %v99 = vsub.f32 %v93, %v96
    %v100 = vsub.f32 %v94, %v97
    %v101 = vld [vmem:[%s3] sm:$0xff]
    %v102 = vld [vmem:[%s3 + $0x8] sm:$0xff]
    %v103 = vld [vmem:[%s3 + $0x10] sm:$0xff]
    %v104 = vld [vmem:[%s3 + $0x18] sm:$0xff]
    loop: start=0, step=1, limit=16
    $region37: #{tpu_custom_call.1} parent=1 // loop_pre_header
      _
    $region38: #{tpu_custom_call.1} parent=1 // loop_header
      %s106 = sphi 0, %s110
      %p107 = scmp.ge.s32.totalorder %s106, 16
      %v111 = vphi 0.0, %v271
      %v112 = vphi 0.0, %v272
      %v113 = vphi 0.0, %v273
      %v114 = vphi 0.0, %v274
      %v115 = vphi 0.0, %v279
      %v116 = vphi 0.0, %v280
      %v117 = vphi 0.0, %v281
      %v118 = vphi 0.0, %v282
    $region39: #{tpu_custom_call.1} parent=1 // loop_header_branch
      %109 = sbr.rel (%p107) target = $region43
    $region40: #{tpu_custom_call.1} parent=1 // loop_body
      %s119 = smul.u32 %s106, 24
      %s120 = scalar_lea.vmem %s0, %s119
      %v121 = vld [vmem:[%s120] sm:$0xff]
      %v122 = vld [vmem:[%s120 + $0x8] sm:$0xff]
      %v123 = vld [vmem:[%s120 + $0x10] sm:$0xf]
      %125 = vset.pattern.permute.xlu0 0
      %126 = vperm.xlu0 %125, %v89
      %v127 = vpop.permute.xlu0 %126
      %130 = vset.pattern.permute.xlu0 0
      %131 = vperm.xlu0 %130, %v90
      %v132 = vpop.permute.xlu0 %131
      %135 = vset.pattern.permute.xlu0 0
      %136 = vperm.xlu0 %135, %v91
      %v137 = vpop.permute.xlu0 %136
      %v139 = vmul.f32 %v121, %v127
      %v140 = vmul.f32 %v122, %v132
      %v141 = vmul.f32 %v123, %v137
      %143 = vset.pattern.permute.xlu0 0
      %144 = vperm.xlu0 %143, %v98
      %v145 = vpop.permute.xlu0 %144
      %148 = vset.pattern.permute.xlu0 0
      %149 = vperm.xlu0 %148, %v99
      %v150 = vpop.permute.xlu0 %149
      %153 = vset.pattern.permute.xlu0 0
      %154 = vperm.xlu0 %153, %v100
      %v155 = vpop.permute.xlu0 %154
      %v157 = vadd.f32 %v139, %v145
      %v158 = vadd.f32 %v140, %v150
      %v159 = vadd.f32 %v141, %v155
      %v160 = vmax.f32 %v157, 0.0
      %v161 = vmax.f32 %v158, 0.0
      %v162 = vmax.f32 %v159, 0.0
      %vm163 = vcmask 162816
      %v165 = vsel %vm163, %v101, 0
      %v168 = vsel %vm163, %v102, 0
      %v171 = vsel %vm163, %v103, 0
      %v174 = vsel %vm163, %v104, 0
      %v177 = vsel %vm57, %v162, 0
      %179 = vmatprep.subr.mxu0 0.0
      %180 = vmatpush1.msra.mxu0 0.0
      %181 = vmatprep.subr.mxu0 0.0
      %182 = vmatpush1.msra.mxu0 0.0
      %183 = vmatprep.subr.mxu0 0.0
      %184 = vmatpush1.msra.mxu0 0.0
      %185 = vmatprep.subr.mxu0 0.0
      %186 = vmatpush1.msra.mxu0 0.0
      %187 = vmatprep.subr.mxu0 0.0
      %188 = vmatpush1.msra.mxu0 0.0
      %189 = vmatprep.subr.mxu0 0.0
      %190 = vmatpush1.msra.mxu0 0.0
      %191 = vmatprep.subr.mxu0 0.0
      %192 = vmatpush1.msra.mxu0 0.0
      %193 = vmatprep.subr.mxu0 0.0
      %194 = vmatpush1.msra.mxu0 0.0
      %195 = vmatprep.subr.mxu0 0.0
      %196 = vmatpush1.msra.mxu0 0.0
      %197 = vmatprep.subr.mxu0 0.0
      %198 = vmatpush1.msra.mxu0 0.0
      %199 = vmatprep.subr.mxu0 0.0
      %200 = vmatpush1.msra.mxu0 0.0
      %201 = vmatprep.subr.mxu0 0.0
      %202 = vmatpush1.msra.mxu0 0.0
      %203 = vmatprep.subr.mxu0 0.0
      %204 = vmatpush1.msra.mxu0 0.0
      %205 = vmatprep.subr.mxu0 0.0
      %206 = vmatpush1.msra.mxu0 %v177
      %207 = vmatprep.subr.mxu0 0.0
      %208 = vmatpush1.msra.mxu0 %v161
      %209 = vmatprep.subr.mxu0 0.0
      %210 = vmatpush1.msra.mxu0 %v160
      %211 = vmatprep.subr.mxu0 0.0
      %212 = vmatpush2.msra.mxu0 0.0
      %213 = vmatprep.subr.mxu0 0.0
      %214 = vmatpush2.msra.mxu0 0.0
      %215 = vmatprep.subr.mxu0 0.0
      %216 = vmatpush2.msra.mxu0 0.0
      %217 = vmatprep.subr.mxu0 0.0
      %218 = vmatpush2.msra.mxu0 0.0
      %219 = vmatprep.subr.mxu0 0.0
      %220 = vmatpush2.msra.mxu0 0.0
      %221 = vmatprep.subr.mxu0 0.0
      %222 = vmatpush2.msra.mxu0 0.0
      %223 = vmatprep.subr.mxu0 0.0
      %224 = vmatpush2.msra.mxu0 0.0
      %225 = vmatprep.subr.mxu0 0.0
      %226 = vmatpush2.msra.mxu0 0.0
      %227 = vmatprep.subr.mxu0 0.0
      %228 = vmatpush2.msra.mxu0 0.0
      %229 = vmatprep.subr.mxu0 0.0
      %230 = vmatpush2.msra.mxu0 0.0
      %231 = vmatprep.subr.mxu0 0.0
      %232 = vmatpush2.msra.mxu0 0.0
      %233 = vmatprep.subr.mxu0 0.0
      %234 = vmatpush2.msra.mxu0 0.0
      %235 = vmatprep.subr.mxu0 0.0
      %236 = vmatpush2.msra.mxu0 0.0
      %237 = vmatprep.subr.mxu0 0.0
      %238 = vmatpush2.msra.mxu0 0.0
      %239 = vmatprep.subr.mxu0 0.0
      %240 = vmatpush2.msra.mxu0 0.0
      %241 = vmatprep.subr.mxu0 0.0
      %242 = vmatpush2.msra.mxu0 0.0
      %243 = vmatprep.mubr.f32.mxu0 0.0
      %244 = vmatmul.mubr.f32.gmra.mxu0 %v165
      %v245 = vpop.f32.mrf.mxu0
      %v246 = vadd.f32 0.0, %v245
      %v247 = vpop.f32.mrf.mxu0
      %248 = vmatprep.mubr.f32.mxu0 0.0
      %249 = vmatmul.mubr.f32.gmra.mxu0 %v168
      %v250 = vpop.f32.mrf.mxu0
      %v251 = vadd.f32 0.0, %v250
      %v252 = vpop.f32.mrf.mxu0
      %253 = vmatprep.mubr.f32.mxu0 0.0
      %254 = vmatmul.mubr.f32.gmra.mxu0 %v171
      %v255 = vpop.f32.mrf.mxu0
      %v256 = vadd.f32 0.0, %v255
      %v257 = vpop.f32.mrf.mxu0
      %258 = vmatprep.mubr.f32.mxu0 0.0
      %259 = vmatmul.mubr.f32.gmra.mxu0 %v174
      %v260 = vpop.f32.mrf.mxu0
      %v261 = vadd.f32 0.0, %v260
      %v262 = vpop.f32.mrf.mxu0
      %263 = vdwg.mxu0
      %s264 = sadd.s32 %s106, 1
      %s265 = smul.u32 %s264, 32
      %s266 = scalar_lea.vmem [#allocation2], %s265
      %267 = vst [vmem:[%s266] sm:$0xff] %v246
      %268 = vst [vmem:[%s266 + $0x8] sm:$0xff] %v251
      %269 = vst [vmem:[%s266 + $0x10] sm:$0xff] %v256
      %270 = vst [vmem:[%s266 + $0x18] sm:$0xff] %v261
      %v271 = vadd.f32 %v111, %v246
      %v272 = vadd.f32 %v112, %v251
      %v273 = vadd.f32 %v113, %v256
      %v274 = vadd.f32 %v114, %v261
      %v275 = vmul.f32 %v246, %v246
      %v276 = vmul.f32 %v251, %v251
      %v277 = vmul.f32 %v256, %v256
      %v278 = vmul.f32 %v261, %v261
      %v279 = vadd.f32 %v115, %v275
      %v280 = vadd.f32 %v116, %v276
      %v281 = vadd.f32 %v117, %v277
      %v282 = vadd.f32 %v118, %v278
    $region41: #{tpu_custom_call.1} parent=1 // loop_footer
      %s110 = sadd.s32 1, %s106
    $region42: #{tpu_custom_call.1} parent=1 // loop_footer_branch
      %105 = sbr.rel target = $region38
    $region43: #{tpu_custom_call.1} parent=1 // loop_exit
      _
    %283 = vadd.xlane.f32.xlu0 %v111
    %v284 = vpop.xlane.xlu0 %283
    %285 = vadd.xlane.f32.xlu0 %v112
    %v286 = vpop.xlane.xlu0 %285
    %287 = vadd.xlane.f32.xlu0 %v113
    %v288 = vpop.xlane.xlu0 %287
    %289 = vadd.xlane.f32.xlu0 %v114
    %v290 = vpop.xlane.xlu0 %289
    %v291 = vmul.f32 %v284, 0.00048828125
    %v292 = vmul.f32 %v286, 0.00048828125
    %v293 = vmul.f32 %v288, 0.00048828125
    %v294 = vmul.f32 %v290, 0.00048828125
    %295 = vadd.xlane.f32.xlu0 %v115
    %v296 = vpop.xlane.xlu0 %295
    %297 = vadd.xlane.f32.xlu0 %v116
    %v298 = vpop.xlane.xlu0 %297
    %299 = vadd.xlane.f32.xlu0 %v117
    %v300 = vpop.xlane.xlu0 %299
    %301 = vadd.xlane.f32.xlu0 %v118
    %v302 = vpop.xlane.xlu0 %301
    %v303 = vmul.f32 %v296, 0.00048828125
    %v304 = vmul.f32 %v298, 0.00048828125
    %v305 = vmul.f32 %v300, 0.00048828125
    %v306 = vmul.f32 %v302, 0.00048828125
    %v307 = vmul.f32 %v291, %v291
    %v308 = vmul.f32 %v292, %v292
    %v309 = vmul.f32 %v293, %v293
    %v310 = vmul.f32 %v294, %v294
    %v311 = vsub.f32 %v303, %v307
    %v312 = vsub.f32 %v304, %v308
    %v313 = vsub.f32 %v305, %v309
    %v314 = vsub.f32 %v306, %v310
    %v315 = vld [vmem:[%s4] sm:$0xff]
    %v316 = vld [vmem:[%s4 + $0x8] sm:$0xff]
    %v317 = vld [vmem:[%s4 + $0x10] sm:$0xff]
    %v318 = vld [vmem:[%s4 + $0x18] sm:$0xff]
    %v319 = vadd.f32 %v311, 1e-05
    %v320 = vadd.f32 %v312, 1e-05
    %v321 = vadd.f32 %v313, 1e-05
    %v322 = vadd.f32 %v314, 1e-05
    %v323 = vrsqrt.pop %v319
    %v324 = vrsqrt.pop %v320
    %v325 = vrsqrt.pop %v321
    %v326 = vrsqrt.pop %v322
    %v327 = vmul.f32 %v315, %v323
    %v328 = vmul.f32 %v316, %v324
    %v329 = vmul.f32 %v317, %v325
    %v330 = vmul.f32 %v318, %v326
    %v331 = vld [vmem:[%s5] sm:$0xff]
    %v332 = vld [vmem:[%s5 + $0x8] sm:$0xff]
    %v333 = vld [vmem:[%s5 + $0x10] sm:$0xff]
    %v334 = vld [vmem:[%s5 + $0x18] sm:$0xff]
    %v335 = vmul.f32 %v291, %v327
    %v336 = vmul.f32 %v292, %v328
    %v337 = vmul.f32 %v293, %v329
    %v338 = vmul.f32 %v294, %v330
    %v339 = vsub.f32 %v331, %v335
    %v340 = vsub.f32 %v332, %v336
    %v341 = vsub.f32 %v333, %v337
    %v342 = vsub.f32 %v334, %v338
    %343 = vst [vmem:[#allocation2] sm:$0xff] 0.0
    %344 = vst [vmem:[#allocation2 + $0x8] sm:$0xff] 0.0
    %345 = vst [vmem:[#allocation2 + $0x10] sm:$0xff] 0.0
    %346 = vst [vmem:[#allocation2 + $0x18] sm:$0xff] 0.0
    %s347 = scalar_lea.vmem [#allocation2], 544
    %348 = vst [vmem:[%s347] sm:$0xff] 0.0
    %349 = vst [vmem:[%s347 + $0x8] sm:$0xff] 0.0
    %350 = vst [vmem:[%s347 + $0x10] sm:$0xff] 0.0
    %351 = vst [vmem:[%s347 + $0x18] sm:$0xff] 0.0
    loop: start=0, step=1, limit=16
    $region44: #{tpu_custom_call.1} parent=1 // loop_pre_header
      _
    $region45: #{tpu_custom_call.1} parent=1 // loop_header
      %s353 = sphi 0, %s357
      %p354 = scmp.ge.s32.totalorder %s353, 16
    $region46: #{tpu_custom_call.1} parent=1 // loop_header_branch
      %356 = sbr.rel (%p354) target = $region50
    $region47: #{tpu_custom_call.1} parent=1 // loop_body
      %s358 = sadd.s32 %s353, 1
      %s359 = smul.u32 %s358, 32
      %s360 = scalar_lea.vmem [#allocation2], %s359
      %v361 = vld [vmem:[%s360] sm:$0xff]
      %v362 = vld [vmem:[%s360 + $0x8] sm:$0xff]
      %v363 = vld [vmem:[%s360 + $0x10] sm:$0xff]
      %v364 = vld [vmem:[%s360 + $0x18] sm:$0xff]
      %366 = vset.pattern.permute.xlu0 0
      %367 = vperm.xlu0 %366, %v327
      %v368 = vpop.permute.xlu0 %367
      %371 = vset.pattern.permute.xlu0 0
      %372 = vperm.xlu0 %371, %v328
      %v373 = vpop.permute.xlu0 %372
      %376 = vset.pattern.permute.xlu0 0
      %377 = vperm.xlu0 %376, %v329
      %v378 = vpop.permute.xlu0 %377
      %381 = vset.pattern.permute.xlu0 0
      %382 = vperm.xlu0 %381, %v330
      %v383 = vpop.permute.xlu0 %382
      %v385 = vmul.f32 %v361, %v368
      %v386 = vmul.f32 %v362, %v373
      %v387 = vmul.f32 %v363, %v378
      %v388 = vmul.f32 %v364, %v383
      %390 = vset.pattern.permute.xlu0 0
      %391 = vperm.xlu0 %390, %v339
      %v392 = vpop.permute.xlu0 %391
      %395 = vset.pattern.permute.xlu0 0
      %396 = vperm.xlu0 %395, %v340
      %v397 = vpop.permute.xlu0 %396
      %400 = vset.pattern.permute.xlu0 0
      %401 = vperm.xlu0 %400, %v341
      %v402 = vpop.permute.xlu0 %401
      %405 = vset.pattern.permute.xlu0 0
      %406 = vperm.xlu0 %405, %v342
      %v407 = vpop.permute.xlu0 %406
      %v409 = vadd.f32 %v385, %v392
      %v410 = vadd.f32 %v386, %v397
      %v411 = vadd.f32 %v387, %v402
      %v412 = vadd.f32 %v388, %v407
      %v413 = vmax.f32 %v409, 0.0
      %v414 = vmax.f32 %v410, 0.0
      %v415 = vmax.f32 %v411, 0.0
      %v416 = vmax.f32 %v412, 0.0
      %417 = vst [vmem:[%s360] sm:$0xff] %v413
      %418 = vst [vmem:[%s360 + $0x8] sm:$0xff] %v414
      %419 = vst [vmem:[%s360 + $0x10] sm:$0xff] %v415
      %420 = vst [vmem:[%s360 + $0x18] sm:$0xff] %v416
    $region48: #{tpu_custom_call.1} parent=1 // loop_footer
      %s357 = sadd.s32 1, %s353
    $region49: #{tpu_custom_call.1} parent=1 // loop_footer_branch
      %352 = sbr.rel target = $region45
    $region50: #{tpu_custom_call.1} parent=1 // loop_exit
      _
    %v421 = vld [vmem:[%s6] sm:$0xff]
    %v422 = vld [vmem:[%s6 + $0x8] sm:$0xff]
    %v423 = vld [vmem:[%s6 + $0x10] sm:$0xff]
    loop: start=0, step=1, limit=16
    $region51: #{tpu_custom_call.1} parent=1 // loop_pre_header
      _
    $region52: #{tpu_custom_call.1} parent=1 // loop_header
      %s425 = sphi 0, %s429
      %p426 = scmp.ge.s32.totalorder %s425, 16
    $region53: #{tpu_custom_call.1} parent=1 // loop_header_branch
      %428 = sbr.rel (%p426) target = $region57
    $region54: #{tpu_custom_call.1} parent=1 // loop_body
      %s430 = smul.u32 %s425, 32
      %s431 = scalar_lea.vmem [#allocation2], %s430
      %v432 = vld [vmem:[%s431] sm:$0xff]
      %v433 = vld [vmem:[%s431 + $0x8] sm:$0xff]
      %v434 = vld [vmem:[%s431 + $0x10] sm:$0xff]
      %v435 = vld [vmem:[%s431 + $0x18] sm:$0xff]
      %v436 = vld [vmem:[%s431 + $0x20] sm:$0xff]
      %v437 = vld [vmem:[%s431 + $0x28] sm:$0xff]
      %v438 = vld [vmem:[%s431 + $0x30] sm:$0xff]
      %v439 = vld [vmem:[%s431 + $0x38] sm:$0xff]
      %v440 = vld [vmem:[%s431 + $0x40] sm:$0xff]
      %v441 = vld [vmem:[%s431 + $0x48] sm:$0xff]
      %v442 = vld [vmem:[%s431 + $0x50] sm:$0xff]
      %v443 = vld [vmem:[%s431 + $0x58] sm:$0xff]
      %456 = vrot.lane.b32.xlu0 %v432, 8
      %v457 = vpop.permute.xlu0 %456
      %458 = vrot.lane.b32.xlu0 %v433, 8
      %v459 = vpop.permute.xlu0 %458
      %460 = vrot.lane.b32.xlu0 %v434, 8
      %v461 = vpop.permute.xlu0 %460
      %462 = vrot.lane.b32.xlu0 %v435, 8
      %v463 = vpop.permute.xlu0 %462
      %464 = vrot.lane.b32.xlu0 %v436, 8
      %v465 = vpop.permute.xlu0 %464
      %466 = vrot.lane.b32.xlu0 %v437, 8
      %v467 = vpop.permute.xlu0 %466
      %468 = vrot.lane.b32.xlu0 %v438, 8
      %v469 = vpop.permute.xlu0 %468
      %470 = vrot.lane.b32.xlu0 %v439, 8
      %v471 = vpop.permute.xlu0 %470
      %472 = vrot.lane.b32.xlu0 %v440, 8
      %v473 = vpop.permute.xlu0 %472
      %474 = vrot.lane.b32.xlu0 %v441, 8
      %v475 = vpop.permute.xlu0 %474
      %476 = vrot.lane.b32.xlu0 %v442, 8
      %v477 = vpop.permute.xlu0 %476
      %478 = vrot.lane.b32.xlu0 %v443, 8
      %v479 = vpop.permute.xlu0 %478
      %vm492 = vcmask 64512
      %v493 = vsel %vm492, 0.0, %v457
      %v494 = vsel %vm492, 0.0, %v459
      %v495 = vsel %vm492, 0.0, %v461
      %v496 = vsel %vm492, 0.0, %v463
      %v497 = vsel %vm492, 0.0, %v465
      %v498 = vsel %vm492, 0.0, %v467
      %v499 = vsel %vm492, 0.0, %v469
      %v500 = vsel %vm492, 0.0, %v471
      %v501 = vsel %vm492, 0.0, %v473
      %v502 = vsel %vm492, 0.0, %v475
      %v503 = vsel %vm492, 0.0, %v477
      %v504 = vsel %vm492, 0.0, %v479
      %505 = vrot.lane.b32.xlu0 %v432, 120
      %v506 = vpop.permute.xlu0 %505
      %507 = vrot.lane.b32.xlu0 %v433, 120
      %v508 = vpop.permute.xlu0 %507
      %509 = vrot.lane.b32.xlu0 %v434, 120
      %v510 = vpop.permute.xlu0 %509
      %511 = vrot.lane.b32.xlu0 %v435, 120
      %v512 = vpop.permute.xlu0 %511
      %513 = vrot.lane.b32.xlu0 %v436, 120
      %v514 = vpop.permute.xlu0 %513
      %515 = vrot.lane.b32.xlu0 %v437, 120
      %v516 = vpop.permute.xlu0 %515
      %517 = vrot.lane.b32.xlu0 %v438, 120
      %v518 = vpop.permute.xlu0 %517
      %519 = vrot.lane.b32.xlu0 %v439, 120
      %v520 = vpop.permute.xlu0 %519
      %521 = vrot.lane.b32.xlu0 %v440, 120
      %v522 = vpop.permute.xlu0 %521
      %523 = vrot.lane.b32.xlu0 %v441, 120
      %v524 = vpop.permute.xlu0 %523
      %525 = vrot.lane.b32.xlu0 %v442, 120
      %v526 = vpop.permute.xlu0 %525
      %527 = vrot.lane.b32.xlu0 %v443, 120
      %v528 = vpop.permute.xlu0 %527
      %vm541 = vcmask 982016
      %v542 = vsel %vm541, %v506, 0.0
      %v543 = vsel %vm541, %v508, 0.0
      %v544 = vsel %vm541, %v510, 0.0
      %v545 = vsel %vm541, %v512, 0.0
      %v546 = vsel %vm541, %v514, 0.0
      %v547 = vsel %vm541, %v516, 0.0
      %v548 = vsel %vm541, %v518, 0.0
      %v549 = vsel %vm541, %v520, 0.0
      %v550 = vsel %vm541, %v522, 0.0
      %v551 = vsel %vm541, %v524, 0.0
      %v552 = vsel %vm541, %v526, 0.0
      %v553 = vsel %vm541, %v528, 0.0
      %vm554 = vcmask 785408
      %v556 = vsel %vm554, %v422, 0
      %558 = vmatprep.subr.mxu0 0.0
      %559 = vmatpush1.msra.mxu0 0.0
      %560 = vmatprep.subr.mxu0 0.0
      %561 = vmatpush1.msra.mxu0 0.0
      %562 = vmatprep.subr.mxu0 0.0
      %563 = vmatpush1.msra.mxu0 0.0
      %564 = vmatprep.subr.mxu0 0.0
      %565 = vmatpush1.msra.mxu0 0.0
      %566 = vmatprep.subr.mxu0 0.0
      %567 = vmatpush1.msra.mxu0 %v443
      %568 = vmatprep.subr.mxu0 0.0
      %569 = vmatpush1.msra.mxu0 %v442
      %570 = vmatprep.subr.mxu0 0.0
      %571 = vmatpush1.msra.mxu0 %v441
      %572 = vmatprep.subr.mxu0 0.0
      %573 = vmatpush1.msra.mxu0 %v440
      %574 = vmatprep.subr.mxu0 0.0
      %575 = vmatpush1.msra.mxu0 %v439
      %576 = vmatprep.subr.mxu0 0.0
      %577 = vmatpush1.msra.mxu0 %v438
      %578 = vmatprep.subr.mxu0 0.0
      %579 = vmatpush1.msra.mxu0 %v437
      %580 = vmatprep.subr.mxu0 0.0
      %581 = vmatpush1.msra.mxu0 %v436
      %582 = vmatprep.subr.mxu0 0.0
      %583 = vmatpush1.msra.mxu0 %v435
      %584 = vmatprep.subr.mxu0 0.0
      %585 = vmatpush1.msra.mxu0 %v434
      %586 = vmatprep.subr.mxu0 0.0
      %587 = vmatpush1.msra.mxu0 %v433
      %588 = vmatprep.subr.mxu0 0.0
      %589 = vmatpush1.msra.mxu0 %v432
      %590 = vmatprep.subr.mxu0 0.0
      %591 = vmatpush2.msra.mxu0 0.0
      %592 = vmatprep.subr.mxu0 0.0
      %593 = vmatpush2.msra.mxu0 0.0
      %594 = vmatprep.subr.mxu0 0.0
      %595 = vmatpush2.msra.mxu0 0.0
      %596 = vmatprep.subr.mxu0 0.0
      %597 = vmatpush2.msra.mxu0 0.0
      %598 = vmatprep.subr.mxu0 0.0
      %599 = vmatpush2.msra.mxu0 0.0
      %600 = vmatprep.subr.mxu0 0.0
      %601 = vmatpush2.msra.mxu0 0.0
      %602 = vmatprep.subr.mxu0 0.0
      %603 = vmatpush2.msra.mxu0 0.0
      %604 = vmatprep.subr.mxu0 0.0
      %605 = vmatpush2.msra.mxu0 0.0
      %606 = vmatprep.subr.mxu0 0.0
      %607 = vmatpush2.msra.mxu0 0.0
      %608 = vmatprep.subr.mxu0 0.0
      %609 = vmatpush2.msra.mxu0 0.0
      %610 = vmatprep.subr.mxu0 0.0
      %611 = vmatpush2.msra.mxu0 0.0
      %612 = vmatprep.subr.mxu0 0.0
      %613 = vmatpush2.msra.mxu0 0.0
      %614 = vmatprep.subr.mxu0 0.0
      %615 = vmatpush2.msra.mxu0 0.0
      %616 = vmatprep.subr.mxu0 0.0
      %617 = vmatpush2.msra.mxu0 0.0
      %618 = vmatprep.subr.mxu0 0.0
      %619 = vmatpush2.msra.mxu0 0.0
      %620 = vmatprep.subr.mxu0 0.0
      %621 = vmatpush2.msra.mxu0 0.0
      %622 = vmatprep.mubr.f32.mxu0 0.0
      %623 = vmatmul.mubr.f32.gmra.mxu0 %v556
      %v624 = vpop.f32.mrf.mxu0
      %v625 = vadd.f32 0.0, %v624
      %v626 = vpop.f32.mrf.mxu0
      %627 = vdwg.mxu0
      %v629 = vsel %vm554, %v421, 0
      %631 = vmatprep.subr.mxu0 0.0
      %632 = vmatpush1.msra.mxu0 0.0
      %633 = vmatprep.subr.mxu0 0.0
      %634 = vmatpush1.msra.mxu0 0.0
      %635 = vmatprep.subr.mxu0 0.0
      %636 = vmatpush1.msra.mxu0 0.0
      %637 = vmatprep.subr.mxu0 0.0
      %638 = vmatpush1.msra.mxu0 0.0
      %639 = vmatprep.subr.mxu0 0.0
      %640 = vmatpush1.msra.mxu0 %v504
      %641 = vmatprep.subr.mxu0 0.0
      %642 = vmatpush1.msra.mxu0 %v503
      %643 = vmatprep.subr.mxu0 0.0
      %644 = vmatpush1.msra.mxu0 %v502
      %645 = vmatprep.subr.mxu0 0.0
      %646 = vmatpush1.msra.mxu0 %v501
      %647 = vmatprep.subr.mxu0 0.0
      %648 = vmatpush1.msra.mxu0 %v500
      %649 = vmatprep.subr.mxu0 0.0
      %650 = vmatpush1.msra.mxu0 %v499
      %651 = vmatprep.subr.mxu0 0.0
      %652 = vmatpush1.msra.mxu0 %v498
      %653 = vmatprep.subr.mxu0 0.0
      %654 = vmatpush1.msra.mxu0 %v497
      %655 = vmatprep.subr.mxu0 0.0
      %656 = vmatpush1.msra.mxu0 %v496
      %657 = vmatprep.subr.mxu0 0.0
      %658 = vmatpush1.msra.mxu0 %v495
      %659 = vmatprep.subr.mxu0 0.0
      %660 = vmatpush1.msra.mxu0 %v494
      %661 = vmatprep.subr.mxu0 0.0
      %662 = vmatpush1.msra.mxu0 %v493
      %663 = vmatprep.subr.mxu0 0.0
      %664 = vmatpush2.msra.mxu0 0.0
      %665 = vmatprep.subr.mxu0 0.0
      %666 = vmatpush2.msra.mxu0 0.0
      %667 = vmatprep.subr.mxu0 0.0
      %668 = vmatpush2.msra.mxu0 0.0
      %669 = vmatprep.subr.mxu0 0.0
      %670 = vmatpush2.msra.mxu0 0.0
      %671 = vmatprep.subr.mxu0 0.0
      %672 = vmatpush2.msra.mxu0 0.0
      %673 = vmatprep.subr.mxu0 0.0
      %674 = vmatpush2.msra.mxu0 0.0
      %675 = vmatprep.subr.mxu0 0.0
      %676 = vmatpush2.msra.mxu0 0.0
      %677 = vmatprep.subr.mxu0 0.0
      %678 = vmatpush2.msra.mxu0 0.0
      %679 = vmatprep.subr.mxu0 0.0
      %680 = vmatpush2.msra.mxu0 0.0
      %681 = vmatprep.subr.mxu0 0.0
      %682 = vmatpush2.msra.mxu0 0.0
      %683 = vmatprep.subr.mxu0 0.0
      %684 = vmatpush2.msra.mxu0 0.0
      %685 = vmatprep.subr.mxu0 0.0
      %686 = vmatpush2.msra.mxu0 0.0
      %687 = vmatprep.subr.mxu0 0.0
      %688 = vmatpush2.msra.mxu0 0.0
      %689 = vmatprep.subr.mxu0 0.0
      %690 = vmatpush2.msra.mxu0 0.0
      %691 = vmatprep.subr.mxu0 0.0
      %692 = vmatpush2.msra.mxu0 0.0
      %693 = vmatprep.subr.mxu0 0.0
      %694 = vmatpush2.msra.mxu0 0.0
      %695 = vmatprep.mubr.f32.mxu0 0.0
      %696 = vmatmul.mubr.f32.gmra.mxu0 %v629
      %v697 = vpop.f32.mrf.mxu0
      %v698 = vadd.f32 %v625, %v697
      %v699 = vpop.f32.mrf.mxu0
      %700 = vdwg.mxu0
      %v702 = vsel %vm554, %v423, 0
      %704 = vmatprep.subr.mxu0 0.0
      %705 = vmatpush1.msra.mxu0 0.0
      %706 = vmatprep.subr.mxu0 0.0
      %707 = vmatpush1.msra.mxu0 0.0
      %708 = vmatprep.subr.mxu0 0.0
      %709 = vmatpush1.msra.mxu0 0.0
      %710 = vmatprep.subr.mxu0 0.0
      %711 = vmatpush1.msra.mxu0 0.0
      %712 = vmatprep.subr.mxu0 0.0
      %713 = vmatpush1.msra.mxu0 %v553
      %714 = vmatprep.subr.mxu0 0.0
      %715 = vmatpush1.msra.mxu0 %v552
      %716 = vmatprep.subr.mxu0 0.0
      %717 = vmatpush1.msra.mxu0 %v551
      %718 = vmatprep.subr.mxu0 0.0
      %719 = vmatpush1.msra.mxu0 %v550
      %720 = vmatprep.subr.mxu0 0.0
      %721 = vmatpush1.msra.mxu0 %v549
      %722 = vmatprep.subr.mxu0 0.0
      %723 = vmatpush1.msra.mxu0 %v548
      %724 = vmatprep.subr.mxu0 0.0
      %725 = vmatpush1.msra.mxu0 %v547
      %726 = vmatprep.subr.mxu0 0.0
      %727 = vmatpush1.msra.mxu0 %v546
      %728 = vmatprep.subr.mxu0 0.0
      %729 = vmatpush1.msra.mxu0 %v545
      %730 = vmatprep.subr.mxu0 0.0
      %731 = vmatpush1.msra.mxu0 %v544
      %732 = vmatprep.subr.mxu0 0.0
      %733 = vmatpush1.msra.mxu0 %v543
      %734 = vmatprep.subr.mxu0 0.0
      %735 = vmatpush1.msra.mxu0 %v542
      %736 = vmatprep.subr.mxu0 0.0
      %737 = vmatpush2.msra.mxu0 0.0
      %738 = vmatprep.subr.mxu0 0.0
      %739 = vmatpush2.msra.mxu0 0.0
      %740 = vmatprep.subr.mxu0 0.0
      %741 = vmatpush2.msra.mxu0 0.0
      %742 = vmatprep.subr.mxu0 0.0
      %743 = vmatpush2.msra.mxu0 0.0
      %744 = vmatprep.subr.mxu0 0.0
      %745 = vmatpush2.msra.mxu0 0.0
      %746 = vmatprep.subr.mxu0 0.0
      %747 = vmatpush2.msra.mxu0 0.0
      %748 = vmatprep.subr.mxu0 0.0
      %749 = vmatpush2.msra.mxu0 0.0
      %750 = vmatprep.subr.mxu0 0.0
      %751 = vmatpush2.msra.mxu0 0.0
      %752 = vmatprep.subr.mxu0 0.0
      %753 = vmatpush2.msra.mxu0 0.0
      %754 = vmatprep.subr.mxu0 0.0
      %755 = vmatpush2.msra.mxu0 0.0
      %756 = vmatprep.subr.mxu0 0.0
      %757 = vmatpush2.msra.mxu0 0.0
      %758 = vmatprep.subr.mxu0 0.0
      %759 = vmatpush2.msra.mxu0 0.0
      %760 = vmatprep.subr.mxu0 0.0
      %761 = vmatpush2.msra.mxu0 0.0
      %762 = vmatprep.subr.mxu0 0.0
      %763 = vmatpush2.msra.mxu0 0.0
      %764 = vmatprep.subr.mxu0 0.0
      %765 = vmatpush2.msra.mxu0 0.0
      %766 = vmatprep.subr.mxu0 0.0
      %767 = vmatpush2.msra.mxu0 0.0
      %768 = vmatprep.mubr.f32.mxu0 0.0
      %769 = vmatmul.mubr.f32.gmra.mxu0 %v702
      %v770 = vpop.f32.mrf.mxu0
      %v771 = vadd.f32 0.0, %v770
      %v772 = vpop.f32.mrf.mxu0
      %773 = vdwg.mxu0
      %v774 = vadd.f32 %v698, %v771
      %s775 = smul.u32 %s425, 8
      %s776 = scalar_lea.vmem [#allocation3], %s775
      %777 = vst [vmem:[%s776] sm:$0xff] %v774
    $region55: #{tpu_custom_call.1} parent=1 // loop_footer
      %s429 = sadd.s32 1, %s425
    $region56: #{tpu_custom_call.1} parent=1 // loop_footer_branch
      %424 = sbr.rel target = $region52
    $region57: #{tpu_custom_call.1} parent=1 // loop_exit
      _
    // Predicated region
    $region58: #{tpu_custom_call.1} parent=1 // pred_check
      _
    $region59: #{tpu_custom_call.1} parent=1 // pred_check_branch
      %779 = sbr.rel (0) target = $region61
    $region60: #{tpu_custom_call.1} parent=1 // pred_region
      %s781 = ssub.s32 2048, 2048
      %782 = vsyncadd [#allocation4], %s781
      %s783 = sshll.u32 [#allocation3], 4
      %s784 = int_to_ptr.vmem [resolvable:$true] %s783
      %789 = dma.vmem_to_hbm [thread:$0]  %s784, 2048, %s7, [#allocation4], 128, 128, 8
    $region61: #{tpu_custom_call.1} parent=1 // pred_fallthru
      _
    // Predicated region
    $region62: #{tpu_custom_call.1} parent=1 // pred_check
      _
    $region63: #{tpu_custom_call.1} parent=1 // pred_check_branch
      %791 = sbr.rel (0) target = $region65
    $region64: #{tpu_custom_call.1} parent=1 // pred_region
      %792 = dma.done [#allocation4], 2048
    $region65: #{tpu_custom_call.1} parent=1 // pred_fallthru
      _
    %793 = vsyncpa [#allocation4], 1

</llo_original>
